<compile_context>
chip_gen: v6e
topology: v6e:2x2x1
jax: 0.10.0
libtpu: 0.0.40
codegen_flags: <defaults>
</compile_context>

<pallas_src>
import numpy as np
import jax
import jax.numpy as jnp
from jax import lax
from jax.experimental import pallas as pl
from jax.experimental.pallas import tpu as pltpu

# Problem sizes (consistent with GraphNestedModel config).
B = 2            # batch
S = 8            # sequence length
E = 32           # emb_dim
H = 32           # hid_dim
NUM_CHARS = 16
L = 4            # label_class

M = B * S                # rows after folding batch into the matmul M dim
EA = E + 1               # emb_dim + ones column (bias fold)
N_FUSED = 2 * H + L * S  # [va | vb | plane-replicated vd] = 96
N_PAD = 128              # lane-dense padded width of fused weight / output


def graph_nested_kernel(sent_ref, mask_ref, ctab_ref, mtab_ref, wf_ref,
                        place_ref, out_ref):
    """Whole (tiny) problem resident in VMEM; no grid.

    sent_ref  : (M, 1)   int32 char ids
    mask_ref  : (M, 1)   int32 mask ids (0/1)
    ctab_ref  : (NUM_CHARS, EA) char table  [emb | 1]
    mtab_ref  : (2, EA)         gelu(mask table) [gelu(emb) | 1]
    wf_ref    : (EA, 128) fused weight [wa/H | wb | ws plane-replicated | 0]
                (last row holds the matching fused biases)
    place_ref : (L*S, 128) 0/1 placement, place[l*S+j, j*L+l] = 1
    out_ref   : (M, 128)  lanes 0..S*L-1 hold row-major (B,S,S,L) softmax
    """
    # ---- embedding gathers via exact one-hot MXU matmuls -------------------
    sent = sent_ref[...]                                      # (M, 1) int32
    mask = mask_ref[...]                                      # (M, 1) int32
    iota_c = lax.broadcasted_iota(jnp.int32, (M, NUM_CHARS), 1)
    iota_m = lax.broadcasted_iota(jnp.int32, (M, 2), 1)
    oh_c = (sent == iota_c).astype(jnp.float32)               # (M, NUM_CHARS)
    oh_m = (mask == iota_m).astype(jnp.float32)               # (M, 2)

    ce = jnp.dot(oh_c, ctab_ref[...], preferred_element_type=jnp.float32)  # (M, EA)
    me = jnp.dot(oh_m, mtab_ref[...], preferred_element_type=jnp.float32)  # (M, EA)
    vemb = ce * me                                            # (M, EA), last col == 1

    # ---- one fused MXU pass for all three linear layers (bias folded) ------
    fused = jnp.dot(vemb, wf_ref[...],
                    preferred_element_type=jnp.float32)       # (M, 128)
    va = fused[:, 0:H]                                        # linA(vemb)/H
    vb = jax.nn.sigmoid(fused[:, H:2 * H])                    # sigmoid(linB(vemb))
    vdb = jnp.maximum(fused[:, 2 * H:2 * H + L * S], 0.0)     # (M, L*S): vd[row, l] replicated over j

    # ---- vc for BOTH batches in one MXU op; take the diagonal 8x8 blocks ---
    vc_full = lax.dot_general(va, vb, (((1,), (1,)), ((), ())),
                              preferred_element_type=jnp.float32)  # (M, M)

    planes = []
    for b in range(B):                                        # statically unrolled, B = 2
        r0 = b * S
        vc_b = vc_full[r0:r0 + S, r0:r0 + S]                  # (S, S)
        vdb_b = vdb[r0:r0 + S, :]                             # (S, L*S)

        # pred[i, j, l] = vc_b[i, j] * vd[i, l]; softmax over l, unrolled (L = 4).
        p = [vc_b * vdb_b[:, l * S:(l + 1) * S] for l in range(L)]
        mx = jnp.maximum(jnp.maximum(p[0], p[1]), jnp.maximum(p[2], p[3]))
        e = [jnp.exp(pi - mx) for pi in p]
        inv = pl.reciprocal(e[0] + e[1] + e[2] + e[3], approx=True)
        planes.append(jnp.concatenate([ei * inv for ei in e], axis=1))  # (S, L*S)

    planes_all = jnp.concatenate(planes, axis=0)              # (M, L*S) plane-major

    # One 0/1 placement matmul producing the full 128-lane slab
    # (lanes >= S*L are zero) -> single unmasked full-width store.
    out_ref[...] = jnp.dot(planes_all, place_ref[...],
                           preferred_element_type=jnp.float32)  # (M, 128)


def prepare_params(params):
    """One-time fusion of static weights (hoisted out of the hot path)."""
    char_tab, mask_tab, wa, ba, wb, bb, ws, bs = params

    # Ones column appended to both tables -> vemb gets an exact bias column.
    ctab = jnp.concatenate([char_tab, jnp.ones((NUM_CHARS, 1), jnp.float32)], axis=1)
    mtab = jnp.concatenate([jax.nn.gelu(mask_tab, approximate=False),
                            jnp.ones((2, 1), jnp.float32)], axis=1)

    # Fused weight with bias row appended; 1/H folded into the linA columns;
    # split columns replicated S times (relu commutes with 0/1 replication).
    wa_aug = jnp.concatenate([wa, ba], axis=0) * (1.0 / H)    # (EA, H)
    wb_aug = jnp.concatenate([wb, bb], axis=0)                # (EA, H)
    ws_aug = jnp.concatenate([ws, bs], axis=0)                # (EA, L)
    ws_rep = jnp.repeat(ws_aug, S, axis=1)                    # (EA, L*S)
    pad = jnp.zeros((EA, N_PAD - N_FUSED), jnp.float32)
    wf = jnp.concatenate([wa_aug, wb_aug, ws_rep, pad], axis=1)  # (EA, 128)

    # 0/1 placement: plane-major (l*S + j) lanes -> row-major (j*L + l) lanes,
    # already padded to 128 output lanes (cols >= S*L stay zero).
    place_np = np.zeros((L * S, N_PAD), np.float32)
    for l in range(L):
        for j in range(S):
            place_np[l * S + j, j * L + l] = 1.0
    place = jnp.asarray(place_np)

    return ctab, mtab, wf, place


def graph_nested_forward(sent, mask, prepared):
    ctab, mtab, wf, place = prepared
    sent2 = sent.reshape(M, 1).astype(jnp.int32)
    mask2 = mask.reshape(M, 1).astype(jnp.int32)

    vmem = lambda: pl.BlockSpec(memory_space=pltpu.MemorySpace.VMEM)

    out128 = pl.pallas_call(
        graph_nested_kernel,
        out_shape=jax.ShapeDtypeStruct((M, N_PAD), jnp.float32),
        in_specs=[vmem() for _ in range(6)],
        out_specs=vmem(),
    )(sent2, mask2, ctab, mtab, wf, place)

    # Lane-dense (M, 128) slab -> (B, S, S, L): wrapper-side layout plumbing.
    return out128[:, :S * L].reshape(B, S, S, L)


def reference_forward(sent, mask, params):
    # Pure-JAX reference mirroring the PyTorch module.
    char_tab, mask_tab, wa, ba, wb, bb, ws, bs = params
    ce = char_tab[sent]                                   # (B, S, E)
    me = mask_tab[mask]                                   # (B, S, E)
    vemb = ce * jax.nn.gelu(me, approximate=False)
    va = vemb @ wa + ba                                   # (B, S, H)
    vb = jax.nn.sigmoid(vemb @ wb + bb)                   # (B, S, H)
    vc = (1.0 / H) * jnp.einsum('bik,bjk->bij', va, vb)   # (B, S, S)
    vd = jnp.maximum(vemb @ ws + bs, 0.0)                 # (B, S, L)
    pred = vc[..., None] * vd[:, :, None, :]              # (B, S, S, L)
    return jax.nn.softmax(pred, axis=-1)


if __name__ == "__main__":
    key = jax.random.PRNGKey(0)
    ks = jax.random.split(key, 10)

    # Deterministic synthetic parameters (shapes from GraphNestedModel.__init__).
    char_tab = jax.random.normal(ks[0], (NUM_CHARS, E), jnp.float32)      # char_emb
    mask_tab = jax.random.normal(ks[1], (2, E), jnp.float32)              # mask_emb
    wa = jax.random.normal(ks[2], (E, H), jnp.float32) / np.sqrt(E)       # linA weight (in, out)
    ba = jax.random.normal(ks[3], (1, H), jnp.float32) * 0.01             # linA bias
    wb = jax.random.normal(ks[4], (E, H), jnp.float32) / np.sqrt(E)       # linB weight
    bb = jax.random.normal(ks[5], (1, H), jnp.float32) * 0.01             # linB bias
    ws = jax.random.normal(ks[6], (E, L), jnp.float32) / np.sqrt(E)       # split weight
    bs = jax.random.normal(ks[7], (1, L), jnp.float32) * 0.01             # split bias
    params = (char_tab, mask_tab, wa, ba, wb, bb, ws, bs)

    sent = jax.random.randint(ks[8], (B, S), 0, NUM_CHARS, dtype=jnp.int32)
    mask = jax.random.randint(ks[9], (B, S), 0, 2, dtype=jnp.int32)

    # One-time parameter fusion, then a jitted single-kernel forward.
    prepared = prepare_params(params)
    fwd = jax.jit(graph_nested_forward)

    out = fwd(sent, mask, prepared)
    jax.block_until_ready(out)

    ref = reference_forward(sent, mask, params)
    assert out.shape == (B, S, S, L) and out.dtype == jnp.float32
    assert np.allclose(np.asarray(out), np.asarray(ref), atol=1e-3, rtol=1e-3), \
        "Pallas kernel output diverges from reference"

    print("KERNEL_OK")
</pallas_src>

<mosaic_0001>
module attributes {stable_mosaic.version = 11 : i64} {
  func.func @graph_nested_kernel(%arg0: memref<16x1xi32, #tpu.memory_space<vmem>>, %arg1: memref<16x1xi32, #tpu.memory_space<vmem>>, %arg2: memref<16x33xf32, #tpu.memory_space<vmem>>, %arg3: memref<2x33xf32, #tpu.memory_space<vmem>>, %arg4: memref<33x128xf32, #tpu.memory_space<vmem>>, %arg5: memref<32x128xf32, #tpu.memory_space<vmem>>, %arg6: memref<16x128xf32, #tpu.memory_space<vmem>>) attributes {dimension_semantics = [], scalar_prefetch = 0 : i64, scratch_operands = 0 : i64, tpu.core_type = #tpu.core_type<tc>} {
    %c0 = arith.constant 0 : index
    %c0_0 = arith.constant 0 : index
    %0 = vector.load %arg0[%c0, %c0_0] : memref<16x1xi32, #tpu.memory_space<vmem>>, vector<16x1xi32>
    %c0_1 = arith.constant 0 : index
    %c0_2 = arith.constant 0 : index
    %1 = vector.load %arg1[%c0_1, %c0_2] : memref<16x1xi32, #tpu.memory_space<vmem>>, vector<16x1xi32>
    %2 = tpu.iota {dimensions = array<i32: 1>} : vector<16x16xi32>
    %3 = tpu.iota {dimensions = array<i32: 1>} : vector<16x2xi32>
    %4 = vector.broadcast %0 : vector<16x1xi32> to vector<16x16xi32>
    %5 = arith.cmpi eq, %4, %2 : vector<16x16xi32>
    %6 = arith.extui %5 : vector<16x16xi1> to vector<16x16xi32>
    %7 = arith.sitofp %6 : vector<16x16xi32> to vector<16x16xf32>
    %8 = vector.broadcast %1 : vector<16x1xi32> to vector<16x2xi32>
    %9 = arith.cmpi eq, %8, %3 : vector<16x2xi32>
    %10 = arith.extui %9 : vector<16x2xi1> to vector<16x2xi32>
    %11 = arith.sitofp %10 : vector<16x2xi32> to vector<16x2xf32>
    %c0_3 = arith.constant 0 : index
    %c0_4 = arith.constant 0 : index
    %12 = vector.load %arg2[%c0_3, %c0_4] : memref<16x33xf32, #tpu.memory_space<vmem>>, vector<16x33xf32>
    %cst = arith.constant dense<0.000000e+00> : vector<16x33xf32>
    %13 = tpu.matmul %7, %12, %cst {dimension_numbers = #tpu.dot_dimension_numbers<[1], [0], [0], [1], [0, 0, 1, 1], [], []>} : vector<16x16xf32>, vector<16x33xf32>, vector<16x33xf32> -> vector<16x33xf32>
    %c0_5 = arith.constant 0 : index
    %c0_6 = arith.constant 0 : index
    %14 = vector.load %arg3[%c0_5, %c0_6] : memref<2x33xf32, #tpu.memory_space<vmem>>, vector<2x33xf32>
    %cst_7 = arith.constant dense<0.000000e+00> : vector<16x33xf32>
    %15 = tpu.matmul %11, %14, %cst_7 {dimension_numbers = #tpu.dot_dimension_numbers<[1], [0], [0], [1], [0, 0, 1, 1], [], []>} : vector<16x2xf32>, vector<2x33xf32>, vector<16x33xf32> -> vector<16x33xf32>
    %16 = arith.mulf %13, %15 : vector<16x33xf32>
    %c0_8 = arith.constant 0 : index
    %c0_9 = arith.constant 0 : index
    %17 = vector.load %arg4[%c0_8, %c0_9] : memref<33x128xf32, #tpu.memory_space<vmem>>, vector<33x128xf32>
    %cst_10 = arith.constant dense<0.000000e+00> : vector<16x128xf32>
    %18 = tpu.matmul %16, %17, %cst_10 {dimension_numbers = #tpu.dot_dimension_numbers<[1], [0], [0], [1], [0, 0, 1, 1], [], []>} : vector<16x33xf32>, vector<33x128xf32>, vector<16x128xf32> -> vector<16x128xf32>
    %19 = vector.extract_strided_slice %18 {offsets = [0, 0], sizes = [16, 32], strides = [1, 1]} : vector<16x128xf32> to vector<16x32xf32>
    %20 = vector.extract_strided_slice %18 {offsets = [0, 32], sizes = [16, 32], strides = [1, 1]} : vector<16x128xf32> to vector<16x32xf32>
    %21 = arith.negf %20 : vector<16x32xf32>
    %22 = math.exp %21 : vector<16x32xf32>
    %cst_11 = arith.constant 1.000000e+00 : f32
    %23 = vector.broadcast %cst_11 : f32 to vector<16x32xf32>
    %24 = arith.addf %23, %22 : vector<16x32xf32>
    %25 = arith.divf %23, %24 : vector<16x32xf32>
    %26 = vector.extract_strided_slice %18 {offsets = [0, 64], sizes = [16, 32], strides = [1, 1]} : vector<16x128xf32> to vector<16x32xf32>
    %cst_12 = arith.constant 0.000000e+00 : f32
    %27 = vector.broadcast %cst_12 : f32 to vector<16x32xf32>
    %28 = arith.maximumf %26, %27 : vector<16x32xf32>
    %cst_13 = arith.constant dense<0.000000e+00> : vector<16x16xf32>
    %29 = tpu.matmul %19, %25, %cst_13 {dimension_numbers = #tpu.dot_dimension_numbers<[1], [1], [0], [0], [0, 0, 1, 0], [], []>} : vector<16x32xf32>, vector<16x32xf32>, vector<16x16xf32> -> vector<16x16xf32>
    %30 = vector.extract_strided_slice %29 {offsets = [0, 0], sizes = [8, 8], strides = [1, 1]} : vector<16x16xf32> to vector<8x8xf32>
    %31 = vector.extract_strided_slice %28 {offsets = [0, 0], sizes = [8, 32], strides = [1, 1]} : vector<16x32xf32> to vector<8x32xf32>
    %32 = vector.extract_strided_slice %31 {offsets = [0, 0], sizes = [8, 8], strides = [1, 1]} : vector<8x32xf32> to vector<8x8xf32>
    %33 = arith.mulf %30, %32 : vector<8x8xf32>
    %34 = vector.extract_strided_slice %31 {offsets = [0, 8], sizes = [8, 8], strides = [1, 1]} : vector<8x32xf32> to vector<8x8xf32>
    %35 = arith.mulf %30, %34 : vector<8x8xf32>
    %36 = vector.extract_strided_slice %31 {offsets = [0, 16], sizes = [8, 8], strides = [1, 1]} : vector<8x32xf32> to vector<8x8xf32>
    %37 = arith.mulf %30, %36 : vector<8x8xf32>
    %38 = vector.extract_strided_slice %31 {offsets = [0, 24], sizes = [8, 8], strides = [1, 1]} : vector<8x32xf32> to vector<8x8xf32>
    %39 = arith.mulf %30, %38 : vector<8x8xf32>
    %40 = arith.maximumf %33, %35 : vector<8x8xf32>
    %41 = arith.maximumf %37, %39 : vector<8x8xf32>
    %42 = arith.maximumf %40, %41 : vector<8x8xf32>
    %43 = arith.subf %33, %42 : vector<8x8xf32>
    %44 = math.exp %43 : vector<8x8xf32>
    %45 = arith.subf %35, %42 : vector<8x8xf32>
    %46 = math.exp %45 : vector<8x8xf32>
    %47 = arith.subf %37, %42 : vector<8x8xf32>
    %48 = math.exp %47 : vector<8x8xf32>
    %49 = arith.subf %39, %42 : vector<8x8xf32>
    %50 = math.exp %49 : vector<8x8xf32>
    %51 = arith.addf %44, %46 : vector<8x8xf32>
    %52 = arith.addf %51, %48 : vector<8x8xf32>
    %53 = arith.addf %52, %50 : vector<8x8xf32>
    %54 = tpu.reciprocal %53 {approx = true} : vector<8x8xf32> -> vector<8x8xf32>
    %55 = arith.mulf %44, %54 : vector<8x8xf32>
    %56 = arith.mulf %46, %54 : vector<8x8xf32>
    %57 = arith.mulf %48, %54 : vector<8x8xf32>
    %58 = arith.mulf %50, %54 : vector<8x8xf32>
    %59 = tpu.concatenate %55, %56, %57, %58 in 1 : vector<8x8xf32>, vector<8x8xf32>, vector<8x8xf32>, vector<8x8xf32> -> vector<8x32xf32>
    %60 = vector.extract_strided_slice %29 {offsets = [8, 8], sizes = [8, 8], strides = [1, 1]} : vector<16x16xf32> to vector<8x8xf32>
    %61 = vector.extract_strided_slice %28 {offsets = [8, 0], sizes = [8, 32], strides = [1, 1]} : vector<16x32xf32> to vector<8x32xf32>
    %62 = vector.extract_strided_slice %61 {offsets = [0, 0], sizes = [8, 8], strides = [1, 1]} : vector<8x32xf32> to vector<8x8xf32>
    %63 = arith.mulf %60, %62 : vector<8x8xf32>
    %64 = vector.extract_strided_slice %61 {offsets = [0, 8], sizes = [8, 8], strides = [1, 1]} : vector<8x32xf32> to vector<8x8xf32>
    %65 = arith.mulf %60, %64 : vector<8x8xf32>
    %66 = vector.extract_strided_slice %61 {offsets = [0, 16], sizes = [8, 8], strides = [1, 1]} : vector<8x32xf32> to vector<8x8xf32>
    %67 = arith.mulf %60, %66 : vector<8x8xf32>
    %68 = vector.extract_strided_slice %61 {offsets = [0, 24], sizes = [8, 8], strides = [1, 1]} : vector<8x32xf32> to vector<8x8xf32>
    %69 = arith.mulf %60, %68 : vector<8x8xf32>
    %70 = arith.maximumf %63, %65 : vector<8x8xf32>
    %71 = arith.maximumf %67, %69 : vector<8x8xf32>
    %72 = arith.maximumf %70, %71 : vector<8x8xf32>
    %73 = arith.subf %63, %72 : vector<8x8xf32>
    %74 = math.exp %73 : vector<8x8xf32>
    %75 = arith.subf %65, %72 : vector<8x8xf32>
    %76 = math.exp %75 : vector<8x8xf32>
    %77 = arith.subf %67, %72 : vector<8x8xf32>
    %78 = math.exp %77 : vector<8x8xf32>
    %79 = arith.subf %69, %72 : vector<8x8xf32>
    %80 = math.exp %79 : vector<8x8xf32>
    %81 = arith.addf %74, %76 : vector<8x8xf32>
    %82 = arith.addf %81, %78 : vector<8x8xf32>
    %83 = arith.addf %82, %80 : vector<8x8xf32>
    %84 = tpu.reciprocal %83 {approx = true} : vector<8x8xf32> -> vector<8x8xf32>
    %85 = arith.mulf %74, %84 : vector<8x8xf32>
    %86 = arith.mulf %76, %84 : vector<8x8xf32>
    %87 = arith.mulf %78, %84 : vector<8x8xf32>
    %88 = arith.mulf %80, %84 : vector<8x8xf32>
    %89 = tpu.concatenate %85, %86, %87, %88 in 1 : vector<8x8xf32>, vector<8x8xf32>, vector<8x8xf32>, vector<8x8xf32> -> vector<8x32xf32>
    %90 = tpu.concatenate %59, %89 in 0 : vector<8x32xf32>, vector<8x32xf32> -> vector<16x32xf32>
    %c0_14 = arith.constant 0 : index
    %c0_15 = arith.constant 0 : index
    %91 = vector.load %arg5[%c0_14, %c0_15] : memref<32x128xf32, #tpu.memory_space<vmem>>, vector<32x128xf32>
    %cst_16 = arith.constant dense<0.000000e+00> : vector<16x128xf32>
    %92 = tpu.matmul %90, %91, %cst_16 {dimension_numbers = #tpu.dot_dimension_numbers<[1], [0], [0], [1], [0, 0, 1, 1], [], []>} : vector<16x32xf32>, vector<32x128xf32>, vector<16x128xf32> -> vector<16x128xf32>
    %c0_17 = arith.constant 0 : index
    %c0_18 = arith.constant 0 : index
    %93 = vector.load %arg6[%c0_17, %c0_18] : memref<16x128xf32, #tpu.memory_space<vmem>>, vector<16x128xf32>
    tpu.vector_store %arg6[%c0_17, %c0_18], %92 {strides = array<i32>} : memref<16x128xf32, #tpu.memory_space<vmem>>, vector<16x128xf32>,
    return
  }
}

</mosaic_0001>

<llo_original>
// kernel: graph_nested_forward.1
$region0: #{graph_nested_forward.1}
  #allocation0 [shape = 'u32[]', space=smem, size = 0x4, offset = 0x4, fixed_abs, tag = 'smem constant byte address 0x4 - core index']
  #allocation1 [shape = 'u32[144,128]{1,0:T(1,128)}', space=vmem, size = 0x12000, scoped, tag = 'internal scratch']
  %s0 = inlined_call_operand.vmem [shape: s32[16,1], index: 0, kind: input, shape index: {}]
  %s1 = inlined_call_operand.vmem [shape: s32[16,1], index: 1, kind: input, shape index: {}]
  %s2 = inlined_call_operand.hbm [shape: f32[16,33], index: 2, kind: input, shape index: {}]
  %s3 = inlined_call_operand.vmem [shape: f32[2,33], index: 3, kind: input, shape index: {}]
  %s4 = inlined_call_operand.vmem [shape: f32[33,128], index: 4, kind: input, shape index: {}]
  %s5 = inlined_call_operand.hbm [shape: f32[32,128], index: 5, kind: input, shape index: {}]
  %s6 = inlined_call_operand.vmem [shape: f32[16,128], index: 6, kind: output, shape index: {}]
  %s7 = sld [smem:[#allocation0]]
  $region42: #{graph_nested_forward.1} parent=0
    _
  %s9 = ssub.s32 1, %s7
  %s10 = scalar_select 0, %s9, %s7
  $region1: #{graph_nested_forward.1} parent=0
    #allocation2 [shape = 'u8[8192]{0}', space=vmem, size = 0x2000, scoped, tag = 'input window, operand 2, single buffered']
    #allocation3 [shape = 's32[1]{0}', space=sflag, size = 0x4, scoped, tag = 'scoped memory for graph_nested_forward.1']
    #allocation4 [shape = 'u8[16384]{0}', space=vmem, size = 0x4000, scoped, tag = 'input window, operand 5, single buffered']
    #allocation5 [shape = 's32[1]{0}', space=sflag, size = 0x4, scoped, tag = 'scoped memory for graph_nested_forward.1']
    %11 = vsyncpa [#allocation3], 0
    %12 = vsyncpa [#allocation5], 0
    // Predicated region
    $region2: #{graph_nested_forward.1} parent=1 // pred_check
      _
    $region3: #{graph_nested_forward.1} parent=1 // pred_check_branch
      %14 = sbr.rel (0) target = $region5
    $region4: #{graph_nested_forward.1} parent=1 // pred_region
      _
    $region5: #{graph_nested_forward.1} parent=1 // pred_fallthru
      _
    // Predicated region
    $region6: #{graph_nested_forward.1} parent=1 // pred_check
      _
    $region7: #{graph_nested_forward.1} parent=1 // pred_check_branch
      %16 = sbr.rel (0) target = $region9
    $region8: #{graph_nested_forward.1} parent=1 // pred_region
      _
    $region9: #{graph_nested_forward.1} parent=1 // pred_fallthru
      _
    // Predicated region
    $region10: #{graph_nested_forward.1} parent=1 // pred_check
      _
    $region11: #{graph_nested_forward.1} parent=1 // pred_check_branch
      %18 = sbr.rel (0) target = $region13
    $region12: #{graph_nested_forward.1} parent=1 // pred_region
      %s20 = ssub.s32 256, 256
      %21 = vsyncadd [#allocation3], %s20
      %s22 = sshll.u32 [#allocation2], 4
      %s23 = int_to_ptr.vmem [resolvable:$true] %s22
      %28 = dma.hbm_to_vmem [thread:$0]  %s2, 256, %s23, [#allocation3], 128, 128, 8
    $region13: #{graph_nested_forward.1} parent=1 // pred_fallthru
      _
    // Predicated region
    $region14: #{graph_nested_forward.1} parent=1 // pred_check
      _
    $region15: #{graph_nested_forward.1} parent=1 // pred_check_branch
      %30 = sbr.rel (0) target = $region17
    $region16: #{graph_nested_forward.1} parent=1 // pred_region
      _
    $region17: #{graph_nested_forward.1} parent=1 // pred_fallthru
      _
    // Predicated region
    $region18: #{graph_nested_forward.1} parent=1 // pred_check
      _
    $region19: #{graph_nested_forward.1} parent=1 // pred_check_branch
      %32 = sbr.rel (0) target = $region21
    $region20: #{graph_nested_forward.1} parent=1 // pred_region
      _
    $region21: #{graph_nested_forward.1} parent=1 // pred_fallthru
      _
    // Predicated region
    $region22: #{graph_nested_forward.1} parent=1 // pred_check
      _
    $region23: #{graph_nested_forward.1} parent=1 // pred_check_branch
      %34 = sbr.rel (0) target = $region25
    $region24: #{graph_nested_forward.1} parent=1 // pred_region
      %s36 = ssub.s32 512, 512
      %37 = vsyncadd [#allocation5], %s36
      %s38 = sshll.u32 [#allocation4], 4
      %s39 = int_to_ptr.vmem [resolvable:$true] %s38
      %44 = dma.hbm_to_vmem [thread:$0]  %s5, 512, %s39, [#allocation5], 128, 128, 8
    $region25: #{graph_nested_forward.1} parent=1 // pred_fallthru
      _
    // Predicated region
    $region26: #{graph_nested_forward.1} parent=1 // pred_check
      _
    $region27: #{graph_nested_forward.1} parent=1 // pred_check_branch
      %46 = sbr.rel (0) target = $region29
    $region28: #{graph_nested_forward.1} parent=1 // pred_region
      %47 = dma.done [#allocation3], 256
    $region29: #{graph_nested_forward.1} parent=1 // pred_fallthru
      _
    // Predicated region
    $region30: #{graph_nested_forward.1} parent=1 // pred_check
      _
    $region31: #{graph_nested_forward.1} parent=1 // pred_check_branch
      %49 = sbr.rel (0) target = $region33
    $region32: #{graph_nested_forward.1} parent=1 // pred_region
      %50 = dma.done [#allocation5], 512
    $region33: #{graph_nested_forward.1} parent=1 // pred_fallthru
      _
    %v51 = vld [vmem:[%s0] sm:$0xff]
    %v52 = vld [vmem:[%s0 + $0x8] sm:$0xff]
    %v53 = vld [vmem:[%s1] sm:$0xff]
    %v54 = vld [vmem:[%s1 + $0x8] sm:$0xff]
    %v55 = vlaneseq
    %v56 = vand.u32 %v55, 127
    %57 = vset.pattern.permute.xlu0 0
    %58 = vperm.xlu0 %57, %v51
    %v59 = vpop.permute.xlu0 %58
    %60 = vset.pattern.permute.xlu0 0
    %61 = vperm.xlu0 %60, %v52
    %v62 = vpop.permute.xlu0 %61
    %vm63 = vcmp.eq.s32.totalorder %v59, %v56
    %vm64 = vcmp.eq.s32.totalorder %v62, %v56
    %v65 = vsel %vm63, 1, 0
    %v66 = vsel %vm64, 1, 0
    %v67 = vcvt.s32.f32 %v65
    %v68 = vcvt.s32.f32 %v66
    %69 = vset.pattern.permute.xlu0 0
    %70 = vperm.xlu0 %69, %v53
    %v71 = vpop.permute.xlu0 %70
    %72 = vset.pattern.permute.xlu0 0
    %73 = vperm.xlu0 %72, %v54
    %v74 = vpop.permute.xlu0 %73
    %vm75 = vcmp.eq.s32.totalorder %v71, %v56
    %vm76 = vcmp.eq.s32.totalorder %v74, %v56
    %v77 = vsel %vm75, 1, 0
    %v78 = vsel %vm76, 1, 0
    %v79 = vcvt.s32.f32 %v77
    %v80 = vcvt.s32.f32 %v78
    %v81 = vld [vmem:[#allocation2] sm:$0xff]
    %v82 = vld [vmem:[#allocation2 + $0x8] sm:$0xff]
    %vm83 = vcmask 130048
    %v85 = vsel %vm83, %v67, 0
    %v88 = vsel %vm83, %v68, 0
    %90 = vmatprep.subr.mxu0 0.0
    %91 = vmatpush1.msra.mxu0 0.0
    %92 = vmatprep.subr.mxu0 0.0
    %93 = vmatpush1.msra.mxu0 0.0
    %94 = vmatprep.subr.mxu0 0.0
    %95 = vmatpush1.msra.mxu0 0.0
    %96 = vmatprep.subr.mxu0 0.0
    %97 = vmatpush1.msra.mxu0 0.0
    %98 = vmatprep.subr.mxu0 0.0
    %99 = vmatpush1.msra.mxu0 0.0
    %100 = vmatprep.subr.mxu0 0.0
    %101 = vmatpush1.msra.mxu0 0.0
    %102 = vmatprep.subr.mxu0 0.0
    %103 = vmatpush1.msra.mxu0 0.0
    %104 = vmatprep.subr.mxu0 0.0
    %105 = vmatpush1.msra.mxu0 0.0
    %106 = vmatprep.subr.mxu0 0.0
    %107 = vmatpush1.msra.mxu0 0.0
    %108 = vmatprep.subr.mxu0 0.0
    %109 = vmatpush1.msra.mxu0 0.0
    %110 = vmatprep.subr.mxu0 0.0
    %111 = vmatpush1.msra.mxu0 0.0
    %112 = vmatprep.subr.mxu0 0.0
    %113 = vmatpush1.msra.mxu0 0.0
    %114 = vmatprep.subr.mxu0 0.0
    %115 = vmatpush1.msra.mxu0 0.0
    %116 = vmatprep.subr.mxu0 0.0
    %117 = vmatpush1.msra.mxu0 0.0
    %118 = vmatprep.subr.mxu0 0.0
    %119 = vmatpush1.msra.mxu0 %v82
    %120 = vmatprep.subr.mxu0 0.0
    %121 = vmatpush1.msra.mxu0 %v81
    %122 = vmatprep.subr.mxu0 0.0
    %123 = vmatpush2.msra.mxu0 0.0
    %124 = vmatprep.subr.mxu0 0.0
    %125 = vmatpush2.msra.mxu0 0.0
    %126 = vmatprep.subr.mxu0 0.0
    %127 = vmatpush2.msra.mxu0 0.0
    %128 = vmatprep.subr.mxu0 0.0
    %129 = vmatpush2.msra.mxu0 0.0
    %130 = vmatprep.subr.mxu0 0.0
    %131 = vmatpush2.msra.mxu0 0.0
    %132 = vmatprep.subr.mxu0 0.0
    %133 = vmatpush2.msra.mxu0 0.0
    %134 = vmatprep.subr.mxu0 0.0
    %135 = vmatpush2.msra.mxu0 0.0
    %136 = vmatprep.subr.mxu0 0.0
    %137 = vmatpush2.msra.mxu0 0.0
    %138 = vmatprep.subr.mxu0 0.0
    %139 = vmatpush2.msra.mxu0 0.0
    %140 = vmatprep.subr.mxu0 0.0
    %141 = vmatpush2.msra.mxu0 0.0
    %142 = vmatprep.subr.mxu0 0.0
    %143 = vmatpush2.msra.mxu0 0.0
    %144 = vmatprep.subr.mxu0 0.0
    %145 = vmatpush2.msra.mxu0 0.0
    %146 = vmatprep.subr.mxu0 0.0
    %147 = vmatpush2.msra.mxu0 0.0
    %148 = vmatprep.subr.mxu0 0.0
    %149 = vmatpush2.msra.mxu0 0.0
    %150 = vmatprep.subr.mxu0 0.0
    %151 = vmatpush2.msra.mxu0 0.0
    %152 = vmatprep.subr.mxu0 0.0
    %153 = vmatpush2.msra.mxu0 0.0
    %154 = vmatprep.mubr.f32.mxu0 0.0
    %155 = vmatmul.mubr.f32.gmra.mxu0 %v85
    %v156 = vpop.f32.mrf.mxu0
    %v157 = vadd.f32 0.0, %v156
    %v158 = vpop.f32.mrf.mxu0
    %159 = vmatprep.mubr.f32.mxu0 0.0
    %160 = vmatmul.mubr.f32.gmra.mxu0 %v88
    %v161 = vpop.f32.mrf.mxu0
    %v162 = vadd.f32 0.0, %v161
    %v163 = vpop.f32.mrf.mxu0
    %164 = vdwg.mxu0
    %v165 = vld [vmem:[%s3] sm:$0x3]
    %vm166 = vcmask 15360
    %v168 = vsel %vm166, %v79, 0
    %v171 = vsel %vm166, %v80, 0
    %vm173 = vcmask 1041408
    %v175 = vsel %vm173, %v165, 0
    %177 = vmatprep.subr.mxu0 0.0
    %178 = vmatpush1.msra.mxu0 0.0
    %179 = vmatprep.subr.mxu0 0.0
    %180 = vmatpush1.msra.mxu0 0.0
    %181 = vmatprep.subr.mxu0 0.0
    %182 = vmatpush1.msra.mxu0 0.0
    %183 = vmatprep.subr.mxu0 0.0
    %184 = vmatpush1.msra.mxu0 0.0
    %185 = vmatprep.subr.mxu0 0.0
    %186 = vmatpush1.msra.mxu0 0.0
    %187 = vmatprep.subr.mxu0 0.0
    %188 = vmatpush1.msra.mxu0 0.0
    %189 = vmatprep.subr.mxu0 0.0
    %190 = vmatpush1.msra.mxu0 0.0
    %191 = vmatprep.subr.mxu0 0.0
    %192 = vmatpush1.msra.mxu0 0.0
    %193 = vmatprep.subr.mxu0 0.0
    %194 = vmatpush1.msra.mxu0 0.0
    %195 = vmatprep.subr.mxu0 0.0
    %196 = vmatpush1.msra.mxu0 0.0
    %197 = vmatprep.subr.mxu0 0.0
    %198 = vmatpush1.msra.mxu0 0.0
    %199 = vmatprep.subr.mxu0 0.0
    %200 = vmatpush1.msra.mxu0 0.0
    %201 = vmatprep.subr.mxu0 0.0
    %202 = vmatpush1.msra.mxu0 0.0
    %203 = vmatprep.subr.mxu0 0.0
    %204 = vmatpush1.msra.mxu0 0.0
    %205 = vmatprep.subr.mxu0 0.0
    %206 = vmatpush1.msra.mxu0 0.0
    %207 = vmatprep.subr.mxu0 0.0
    %208 = vmatpush1.msra.mxu0 %v175
    %209 = vmatprep.subr.mxu0 0.0
    %210 = vmatpush2.msra.mxu0 0.0
    %211 = vmatprep.subr.mxu0 0.0
    %212 = vmatpush2.msra.mxu0 0.0
    %213 = vmatprep.subr.mxu0 0.0
    %214 = vmatpush2.msra.mxu0 0.0
    %215 = vmatprep.subr.mxu0 0.0
    %216 = vmatpush2.msra.mxu0 0.0
    %217 = vmatprep.subr.mxu0 0.0
    %218 = vmatpush2.msra.mxu0 0.0
    %219 = vmatprep.subr.mxu0 0.0
    %220 = vmatpush2.msra.mxu0 0.0
    %221 = vmatprep.subr.mxu0 0.0
    %222 = vmatpush2.msra.mxu0 0.0
    %223 = vmatprep.subr.mxu0 0.0
    %224 = vmatpush2.msra.mxu0 0.0
    %225 = vmatprep.subr.mxu0 0.0
    %226 = vmatpush2.msra.mxu0 0.0
    %227 = vmatprep.subr.mxu0 0.0
    %228 = vmatpush2.msra.mxu0 0.0
    %229 = vmatprep.subr.mxu0 0.0
    %230 = vmatpush2.msra.mxu0 0.0
    %231 = vmatprep.subr.mxu0 0.0
    %232 = vmatpush2.msra.mxu0 0.0
    %233 = vmatprep.subr.mxu0 0.0
    %234 = vmatpush2.msra.mxu0 0.0
    %235 = vmatprep.subr.mxu0 0.0
    %236 = vmatpush2.msra.mxu0 0.0
    %237 = vmatprep.subr.mxu0 0.0
    %238 = vmatpush2.msra.mxu0 0.0
    %239 = vmatprep.subr.mxu0 0.0
    %240 = vmatpush2.msra.mxu0 0.0
    %241 = vmatprep.mubr.f32.mxu0 0.0
    %242 = vmatmul.mubr.f32.gmra.mxu0 %v168
    %v243 = vpop.f32.mrf.mxu0
    %v244 = vadd.f32 0.0, %v243
    %v245 = vpop.f32.mrf.mxu0
    %246 = vmatprep.mubr.f32.mxu0 0.0
    %247 = vmatmul.mubr.f32.gmra.mxu0 %v171
    %v248 = vpop.f32.mrf.mxu0
    %v249 = vadd.f32 0.0, %v248
    %v250 = vpop.f32.mrf.mxu0
    %251 = vdwg.mxu0
    %v252 = vmul.f32 %v157, %v244
    %v253 = vmul.f32 %v162, %v249
    %v254 = vld [vmem:[%s4] sm:$0xff]
    %v255 = vld [vmem:[%s4 + $0x8] sm:$0xff]
    %v256 = vld [vmem:[%s4 + $0x10] sm:$0xff]
    %v257 = vld [vmem:[%s4 + $0x18] sm:$0xff]
    %v258 = vld [vmem:[%s4 + $0x20] sm:$0x1]
    %vm259 = vcmask 269312
    %v261 = vsel %vm259, %v252, 0
    %v264 = vsel %vm259, %v253, 0
    %vm266 = vcmask 1040384
    %v268 = vsel %vm266, %v258, 0
    %270 = vmatprep.subr.mxu0 0.0
    %271 = vmatpush1.msra.mxu0 0.0
    %272 = vmatprep.subr.mxu0 0.0
    %273 = vmatpush1.msra.mxu0 0.0
    %274 = vmatprep.subr.mxu0 0.0
    %275 = vmatpush1.msra.mxu0 0.0
    %276 = vmatprep.subr.mxu0 0.0
    %277 = vmatpush1.msra.mxu0 0.0
    %278 = vmatprep.subr.mxu0 0.0
    %279 = vmatpush1.msra.mxu0 0.0
    %280 = vmatprep.subr.mxu0 0.0
    %281 = vmatpush1.msra.mxu0 0.0
    %282 = vmatprep.subr.mxu0 0.0
    %283 = vmatpush1.msra.mxu0 0.0
    %284 = vmatprep.subr.mxu0 0.0
    %285 = vmatpush1.msra.mxu0 0.0
    %286 = vmatprep.subr.mxu0 0.0
    %287 = vmatpush1.msra.mxu0 0.0
    %288 = vmatprep.subr.mxu0 0.0
    %289 = vmatpush1.msra.mxu0 0.0
    %290 = vmatprep.subr.mxu0 0.0
    %291 = vmatpush1.msra.mxu0 0.0
    %292 = vmatprep.subr.mxu0 0.0
    %293 = vmatpush1.msra.mxu0 %v268
    %294 = vmatprep.subr.mxu0 0.0
    %295 = vmatpush1.msra.mxu0 %v257
    %296 = vmatprep.subr.mxu0 0.0
    %297 = vmatpush1.msra.mxu0 %v256
    %298 = vmatprep.subr.mxu0 0.0
    %299 = vmatpush1.msra.mxu0 %v255
    %300 = vmatprep.subr.mxu0 0.0
    %301 = vmatpush1.msra.mxu0 %v254
    %302 = vmatprep.subr.mxu0 0.0
    %303 = vmatpush2.msra.mxu0 0.0
    %304 = vmatprep.subr.mxu0 0.0
    %305 = vmatpush2.msra.mxu0 0.0
    %306 = vmatprep.subr.mxu0 0.0
    %307 = vmatpush2.msra.mxu0 0.0
    %308 = vmatprep.subr.mxu0 0.0
    %309 = vmatpush2.msra.mxu0 0.0
    %310 = vmatprep.subr.mxu0 0.0
    %311 = vmatpush2.msra.mxu0 0.0
    %312 = vmatprep.subr.mxu0 0.0
    %313 = vmatpush2.msra.mxu0 0.0
    %314 = vmatprep.subr.mxu0 0.0
    %315 = vmatpush2.msra.mxu0 0.0
    %316 = vmatprep.subr.mxu0 0.0
    %317 = vmatpush2.msra.mxu0 0.0
    %318 = vmatprep.subr.mxu0 0.0
    %319 = vmatpush2.msra.mxu0 0.0
    %320 = vmatprep.subr.mxu0 0.0
    %321 = vmatpush2.msra.mxu0 0.0
    %322 = vmatprep.subr.mxu0 0.0
    %323 = vmatpush2.msra.mxu0 0.0
    %324 = vmatprep.subr.mxu0 0.0
    %325 = vmatpush2.msra.mxu0 0.0
    %326 = vmatprep.subr.mxu0 0.0
    %327 = vmatpush2.msra.mxu0 0.0
    %328 = vmatprep.subr.mxu0 0.0
    %329 = vmatpush2.msra.mxu0 0.0
    %330 = vmatprep.subr.mxu0 0.0
    %331 = vmatpush2.msra.mxu0 0.0
    %332 = vmatprep.subr.mxu0 0.0
    %333 = vmatpush2.msra.mxu0 0.0
    %334 = vmatprep.mubr.f32.mxu0 0.0
    %335 = vmatmul.mubr.f32.gmra.mxu0 %v261
    %v336 = vpop.f32.mrf.mxu0
    %v337 = vadd.f32 0.0, %v336
    %v338 = vpop.f32.mrf.mxu0
    %339 = vmatprep.mubr.f32.mxu0 0.0
    %340 = vmatmul.mubr.f32.gmra.mxu0 %v264
    %v341 = vpop.f32.mrf.mxu0
    %v342 = vadd.f32 0.0, %v341
    %v343 = vpop.f32.mrf.mxu0
    %344 = vdwg.mxu0
    %v345 = vxor.u32 %v337, 2147483648
    %v346 = vxor.u32 %v342, 2147483648
    %v347 = vmul.f32 %v345, 1.442695
    %v348 = vpow.pop %v347
    %v349 = vmul.f32 %v346, 1.442695
    %v350 = vpow.pop %v349
    %v351 = vadd.f32 %v348, 1.0
    %v352 = vadd.f32 %v350, 1.0
    %v353 = vrcp.pop %v351
    %v354 = vmul.f32 1.0, %v353
    %v355 = vrcp.pop %v352
    %v356 = vmul.f32 1.0, %v355
    %v357 = vmax.f32 %v337, 0.0
    %v358 = vmax.f32 %v342, 0.0
    %361 = vrot.lane.b32.xlu0 %v354, 96
    %v362 = vpop.permute.xlu0 %361
    %363 = vrot.lane.b32.xlu0 %v356, 96
    %v364 = vpop.permute.xlu0 %363
    %vm365 = vcmask 261120
    %v367 = vsel %vm365, %v337, 0
    %v370 = vsel %vm365, %v342, 0
    %v372 = vsel %vm365, %v362, 0
    %v374 = vsel %vm365, %v364, 0
    %376 = vmatprep.subr.mxu0 0.0
    %377 = vmatpush1.xpose.msra.mxu0 0.0
    %378 = vmatprep.subr.mxu0 0.0
    %379 = vmatpush1.xpose.msra.mxu0 0.0
    %380 = vmatprep.subr.mxu0 0.0
    %381 = vmatpush1.xpose.msra.mxu0 0.0
    %382 = vmatprep.subr.mxu0 0.0
    %383 = vmatpush1.xpose.msra.mxu0 0.0
    %384 = vmatprep.subr.mxu0 0.0
    %385 = vmatpush1.xpose.msra.mxu0 0.0
    %386 = vmatprep.subr.mxu0 0.0
    %387 = vmatpush1.xpose.msra.mxu0 0.0
    %388 = vmatprep.subr.mxu0 0.0
    %389 = vmatpush1.xpose.msra.mxu0 0.0
    %390 = vmatprep.subr.mxu0 0.0
    %391 = vmatpush1.xpose.msra.mxu0 0.0
    %392 = vmatprep.subr.mxu0 0.0
    %393 = vmatpush1.xpose.msra.mxu0 0.0
    %394 = vmatprep.subr.mxu0 0.0
    %395 = vmatpush1.xpose.msra.mxu0 0.0
    %396 = vmatprep.subr.mxu0 0.0
    %397 = vmatpush1.xpose.msra.mxu0 0.0
    %398 = vmatprep.subr.mxu0 0.0
    %399 = vmatpush1.xpose.msra.mxu0 0.0
    %400 = vmatprep.subr.mxu0 0.0
    %401 = vmatpush1.xpose.msra.mxu0 0.0
    %402 = vmatprep.subr.mxu0 0.0
    %403 = vmatpush1.xpose.msra.mxu0 0.0
    %404 = vmatprep.subr.mxu0 0.0
    %405 = vmatpush1.xpose.msra.mxu0 %v374
    %406 = vmatprep.subr.mxu0 0.0
    %407 = vmatpush1.xpose.msra.mxu0 %v372
    %408 = vmatprep.subr.mxu0 0.0
    %409 = vmatpush2.xpose.msra.mxu0 0.0
    %410 = vmatprep.subr.mxu0 0.0
    %411 = vmatpush2.xpose.msra.mxu0 0.0
    %412 = vmatprep.subr.mxu0 0.0
    %413 = vmatpush2.xpose.msra.mxu0 0.0
    %414 = vmatprep.subr.mxu0 0.0
    %415 = vmatpush2.xpose.msra.mxu0 0.0
    %416 = vmatprep.subr.mxu0 0.0
    %417 = vmatpush2.xpose.msra.mxu0 0.0
    %418 = vmatprep.subr.mxu0 0.0
    %419 = vmatpush2.xpose.msra.mxu0 0.0
    %420 = vmatprep.subr.mxu0 0.0
    %421 = vmatpush2.xpose.msra.mxu0 0.0
    %422 = vmatprep.subr.mxu0 0.0
    %423 = vmatpush2.xpose.msra.mxu0 0.0
    %424 = vmatprep.subr.mxu0 0.0
    %425 = vmatpush2.xpose.msra.mxu0 0.0
    %426 = vmatprep.subr.mxu0 0.0
    %427 = vmatpush2.xpose.msra.mxu0 0.0
    %428 = vmatprep.subr.mxu0 0.0
    %429 = vmatpush2.xpose.msra.mxu0 0.0
    %430 = vmatprep.subr.mxu0 0.0
    %431 = vmatpush2.xpose.msra.mxu0 0.0
    %432 = vmatprep.subr.mxu0 0.0
    %433 = vmatpush2.xpose.msra.mxu0 0.0
    %434 = vmatprep.subr.mxu0 0.0
    %435 = vmatpush2.xpose.msra.mxu0 0.0
    %436 = vmatprep.subr.mxu0 0.0
    %437 = vmatpush2.xpose.msra.mxu0 0.0
    %438 = vmatprep.subr.mxu0 0.0
    %439 = vmatpush2.xpose.msra.mxu0 0.0
    %440 = vmatprep.mubr.f32.mxu0 0.0
    %441 = vmatmul.mubr.f32.gmra.mxu0 %v367
    %v442 = vpop.f32.mrf.mxu0
    %v443 = vadd.f32 0.0, %v442
    %v444 = vpop.f32.mrf.mxu0
    %445 = vmatprep.mubr.f32.mxu0 0.0
    %446 = vmatmul.mubr.f32.gmra.mxu0 %v370
    %v447 = vpop.f32.mrf.mxu0
    %v448 = vadd.f32 0.0, %v447
    %v449 = vpop.f32.mrf.mxu0
    %450 = vdwg.mxu0
    %452 = vrot.lane.b32.xlu0 %v357, 64
    %v453 = vpop.permute.xlu0 %452
    %v455 = vmul.f32 %v443, %v453
    %456 = vrot.lane.b32.xlu0 %v357, 56
    %v457 = vpop.permute.xlu0 %456
    %v459 = vmul.f32 %v443, %v457
    %460 = vrot.lane.b32.xlu0 %v357, 48
    %v461 = vpop.permute.xlu0 %460
    %v463 = vmul.f32 %v443, %v461
    %464 = vrot.lane.b32.xlu0 %v357, 40
    %v465 = vpop.permute.xlu0 %464
    %v467 = vmul.f32 %v443, %v465
    %v468 = vmax.f32 %v455, %v459
    %v469 = vmax.f32 %v463, %v467
    %v470 = vmax.f32 %v468, %v469
    %v471 = vsub.f32 %v455, %v470
    %v472 = vmul.f32 %v471, 1.442695
    %v473 = vpow.pop %v472
    %v474 = vsub.f32 %v459, %v470
    %v475 = vmul.f32 %v474, 1.442695
    %v476 = vpow.pop %v475
    %v477 = vsub.f32 %v463, %v470
    %v478 = vmul.f32 %v477, 1.442695
    %v479 = vpow.pop %v478
    %v480 = vsub.f32 %v467, %v470
    %v481 = vmul.f32 %v480, 1.442695
    %v482 = vpow.pop %v481
    %v483 = vadd.f32 %v473, %v476
    %v484 = vadd.f32 %v483, %v479
    %v485 = vadd.f32 %v484, %v482
    %v486 = vrcp.pop %v485
    %v487 = vmul.f32 %v473, %v486
    %v488 = vmul.f32 %v476, %v486
    %v489 = vmul.f32 %v479, %v486
    %v490 = vmul.f32 %v482, %v486
    %492 = vrot.lane.b32.xlu0 %v488, 8
    %v493 = vpop.permute.xlu0 %492
    %496 = vrot.lane.b32.xlu0 %v489, 16
    %v497 = vpop.permute.xlu0 %496
    %500 = vrot.lane.b32.xlu0 %v490, 24
    %v501 = vpop.permute.xlu0 %500
    %vm503 = vcmask 64512
    %v504 = vsel %vm503, %v487, %v493
    %v505 = vsel %vm83, %v504, %v497
    %vm506 = vcmask 195584
    %v507 = vsel %vm506, %v505, %v501
    %509 = vrot.lane.b32.xlu0 %v358, 72
    %v510 = vpop.permute.xlu0 %509
    %v512 = vmul.f32 %v448, %v510
    %513 = vrot.lane.b32.xlu0 %v358, 64
    %v514 = vpop.permute.xlu0 %513
    %v516 = vmul.f32 %v448, %v514
    %517 = vrot.lane.b32.xlu0 %v358, 56
    %v518 = vpop.permute.xlu0 %517
    %v520 = vmul.f32 %v448, %v518
    %521 = vrot.lane.b32.xlu0 %v358, 48
    %v522 = vpop.permute.xlu0 %521
    %v524 = vmul.f32 %v448, %v522
    %v525 = vmax.f32 %v512, %v516
    %v526 = vmax.f32 %v520, %v524
    %v527 = vmax.f32 %v525, %v526
    %v528 = vsub.f32 %v512, %v527
    %v529 = vmul.f32 %v528, 1.442695
    %v530 = vpow.pop %v529
    %v531 = vsub.f32 %v516, %v527
    %v532 = vmul.f32 %v531, 1.442695
    %v533 = vpow.pop %v532
    %v534 = vsub.f32 %v520, %v527
    %v535 = vmul.f32 %v534, 1.442695
    %v536 = vpow.pop %v535
    %v537 = vsub.f32 %v524, %v527
    %v538 = vmul.f32 %v537, 1.442695
    %v539 = vpow.pop %v538
    %v540 = vadd.f32 %v530, %v533
    %v541 = vadd.f32 %v540, %v536
    %v542 = vadd.f32 %v541, %v539
    %v543 = vrcp.pop %v542
    %v544 = vmul.f32 %v530, %v543
    %v545 = vmul.f32 %v533, %v543
    %v546 = vmul.f32 %v536, %v543
    %v547 = vmul.f32 %v539, %v543
    %549 = vrot.lane.b32.xlu0 %v544, 120
    %v550 = vpop.permute.xlu0 %549
    %553 = vrot.lane.b32.xlu0 %v546, 8
    %v554 = vpop.permute.xlu0 %553
    %557 = vrot.lane.b32.xlu0 %v547, 16
    %v558 = vpop.permute.xlu0 %557
    %v560 = vsel %vm503, %v550, %v545
    %v561 = vsel %vm83, %v560, %v554
    %v562 = vsel %vm506, %v561, %v558
    %v563 = vld [vmem:[#allocation4] sm:$0xff]
    %v564 = vld [vmem:[#allocation4 + $0x8] sm:$0xff]
    %v565 = vld [vmem:[#allocation4 + $0x10] sm:$0xff]
    %v566 = vld [vmem:[#allocation4 + $0x18] sm:$0xff]
    %v568 = vsel %vm365, %v507, 0
    %v571 = vsel %vm365, %v562, 0
    %573 = vmatprep.subr.mxu0 0.0
    %574 = vmatpush1.msra.mxu0 0.0
    %575 = vmatprep.subr.mxu0 0.0
    %576 = vmatpush1.msra.mxu0 0.0
    %577 = vmatprep.subr.mxu0 0.0
    %578 = vmatpush1.msra.mxu0 0.0
    %579 = vmatprep.subr.mxu0 0.0
    %580 = vmatpush1.msra.mxu0 0.0
    %581 = vmatprep.subr.mxu0 0.0
    %582 = vmatpush1.msra.mxu0 0.0
    %583 = vmatprep.subr.mxu0 0.0
    %584 = vmatpush1.msra.mxu0 0.0
    %585 = vmatprep.subr.mxu0 0.0
    %586 = vmatpush1.msra.mxu0 0.0
    %587 = vmatprep.subr.mxu0 0.0
    %588 = vmatpush1.msra.mxu0 0.0
    %589 = vmatprep.subr.mxu0 0.0
    %590 = vmatpush1.msra.mxu0 0.0
    %591 = vmatprep.subr.mxu0 0.0
    %592 = vmatpush1.msra.mxu0 0.0
    %593 = vmatprep.subr.mxu0 0.0
    %594 = vmatpush1.msra.mxu0 0.0
    %595 = vmatprep.subr.mxu0 0.0
    %596 = vmatpush1.msra.mxu0 0.0
    %597 = vmatprep.subr.mxu0 0.0
    %598 = vmatpush1.msra.mxu0 %v566
    %599 = vmatprep.subr.mxu0 0.0
    %600 = vmatpush1.msra.mxu0 %v565
    %601 = vmatprep.subr.mxu0 0.0
    %602 = vmatpush1.msra.mxu0 %v564
    %603 = vmatprep.subr.mxu0 0.0
    %604 = vmatpush1.msra.mxu0 %v563
    %605 = vmatprep.subr.mxu0 0.0
    %606 = vmatpush2.msra.mxu0 0.0
    %607 = vmatprep.subr.mxu0 0.0
    %608 = vmatpush2.msra.mxu0 0.0
    %609 = vmatprep.subr.mxu0 0.0
    %610 = vmatpush2.msra.mxu0 0.0
    %611 = vmatprep.subr.mxu0 0.0
    %612 = vmatpush2.msra.mxu0 0.0
    %613 = vmatprep.subr.mxu0 0.0
    %614 = vmatpush2.msra.mxu0 0.0
    %615 = vmatprep.subr.mxu0 0.0
    %616 = vmatpush2.msra.mxu0 0.0
    %617 = vmatprep.subr.mxu0 0.0
    %618 = vmatpush2.msra.mxu0 0.0
    %619 = vmatprep.subr.mxu0 0.0
    %620 = vmatpush2.msra.mxu0 0.0
    %621 = vmatprep.subr.mxu0 0.0
    %622 = vmatpush2.msra.mxu0 0.0
    %623 = vmatprep.subr.mxu0 0.0
    %624 = vmatpush2.msra.mxu0 0.0
    %625 = vmatprep.subr.mxu0 0.0
    %626 = vmatpush2.msra.mxu0 0.0
    %627 = vmatprep.subr.mxu0 0.0
    %628 = vmatpush2.msra.mxu0 0.0
    %629 = vmatprep.subr.mxu0 0.0
    %630 = vmatpush2.msra.mxu0 0.0
    %631 = vmatprep.subr.mxu0 0.0
    %632 = vmatpush2.msra.mxu0 0.0
    %633 = vmatprep.subr.mxu0 0.0
    %634 = vmatpush2.msra.mxu0 0.0
    %635 = vmatprep.subr.mxu0 0.0
    %636 = vmatpush2.msra.mxu0 0.0
    %637 = vmatprep.mubr.f32.mxu0 0.0
    %638 = vmatmul.mubr.f32.gmra.mxu0 %v568
    %v639 = vpop.f32.mrf.mxu0
    %v640 = vadd.f32 0.0, %v639
    %v641 = vpop.f32.mrf.mxu0
    %642 = vmatprep.mubr.f32.mxu0 0.0
    %643 = vmatmul.mubr.f32.gmra.mxu0 %v571
    %v644 = vpop.f32.mrf.mxu0
    %v645 = vadd.f32 0.0, %v644
    %v646 = vpop.f32.mrf.mxu0
    %647 = vdwg.mxu0
    %648 = vst [vmem:[%s6] sm:$0xff] %v640
    %649 = vst [vmem:[%s6 + $0x8] sm:$0xff] %v645
    // Predicated region
    $region34: #{graph_nested_forward.1} parent=1 // pred_check
      _
    $region35: #{graph_nested_forward.1} parent=1 // pred_check_branch
      %651 = sbr.rel (0) target = $region37
    $region36: #{graph_nested_forward.1} parent=1 // pred_region
      _
    $region37: #{graph_nested_forward.1} parent=1 // pred_fallthru
      _
    // Predicated region
    $region38: #{graph_nested_forward.1} parent=1 // pred_check
      _
    $region39: #{graph_nested_forward.1} parent=1 // pred_check_branch
      %653 = sbr.rel (0) target = $region41
    $region40: #{graph_nested_forward.1} parent=1 // pred_region
      _
    $region41: #{graph_nested_forward.1} parent=1 // pred_fallthru
      _
    %654 = vsyncpa [#allocation3], 1
    %655 = vsyncpa [#allocation5], 1

</llo_original>
